<compile_context>
chip_gen: v7x
topology: tpu7x:2x2x1
jax: 0.10.0
libtpu: 0.0.40
codegen_flags: <defaults>
</compile_context>

<pallas_src>
import functools

import jax
import jax.numpy as jnp
from jax.experimental import pallas as pl
from jax.experimental.pallas import tpu as pltpu

LOG_STD_MIN = -20.0
LOG_STD_MAX = 2.0

_LANE = 128       # TPU vreg lane width  — fused head output padded to this
_SUBLANE = 8      # TPU vreg sublane width — batch tile is a multiple of this
_HID_ALIGN = 128  # hidden dim padded to this (256 packs the v6e/v7x MXU even better)


def _round_up(x: int, m: int) -> int:
    return ((x + m - 1) // m) * m


def _policy_kernel(num_actions, state_ref, w1_ref, b1_ref, w2_ref, b2_ref,
                   wh_ref, bh_ref, out_ref):
    """One batch tile: 2 hidden ReLU layers + fused (mean | log_std) head."""
    cdt = w1_ref.dtype  # compute dtype for the MXU operands (bf16 in production)

    x = state_ref[...].astype(cdt)                                        # [TB, I]

    # x = relu(linear1(state))        (f32 accumulation on the MXU)
    h1 = jnp.dot(x, w1_ref[...], preferred_element_type=jnp.float32)      # [TB, Hp]
    h1 = jnp.maximum(h1 + b1_ref[...], 0.0)

    # x = relu(linear2(x))
    h2 = jnp.dot(h1.astype(cdt), w2_ref[...],
                 preferred_element_type=jnp.float32)                      # [TB, Hp]
    h2 = jnp.maximum(h2 + b2_ref[...], 0.0)

    # Fused head: lanes [0, A) = mean, lanes [A, 2A) = log_std, rest = pad.
    head = jnp.dot(h2.astype(cdt), wh_ref[...],
                   preferred_element_type=jnp.float32)                    # [TB, OUT_PAD]
    head = head + bh_ref[...]

    # Clamp only the log_std lanes.  1-row lane index (constant-folded) is
    # broadcast by the select; padding lanes also get clamped but are sliced
    # away in the wrapper.
    lane = jax.lax.broadcasted_iota(jnp.int32, (1, head.shape[1]), 1)
    out = jnp.where(lane >= num_actions,
                    jnp.clip(head, LOG_STD_MIN, LOG_STD_MAX), head)

    out_ref[...] = out.astype(out_ref.dtype)


def prepare_params(params, compute_dtype=jnp.bfloat16, hidden_align=_HID_ALIGN):
    """One-time prep (hoisted out of the per-call path).

    Fuses the mean/log_std heads into a single lane-dense [Hp, out_pad] weight,
    zero-pads the hidden dim to a multiple of `hidden_align`, and casts the
    matmul weights to `compute_dtype` (bf16 by default -> 2-4x MXU throughput,
    half the resident-weight VMEM).  Biases stay f32 (added to the f32
    accumulator; negligible bandwidth).
    """
    w1, b1 = params["w1"], params["b1"]
    w2, b2 = params["w2"], params["b2"]
    wm, bm = params["wm"], params["bm"]
    ws, bs = params["ws"], params["bs"]

    _, H = w1.shape
    A = wm.shape[1]
    Hp = _round_up(H, hidden_align)
    out_pad = _round_up(max(2 * A, _LANE), _LANE)
    dh = Hp - H

    w_head = jnp.concatenate([wm, ws], axis=1)
    b_head = jnp.concatenate([bm, bs], axis=1)

    return {
        "w1": jnp.pad(w1, ((0, 0), (0, dh))).astype(compute_dtype),
        "b1": jnp.pad(b1, ((0, 0), (0, dh))),
        "w2": jnp.pad(w2, ((0, dh), (0, dh))).astype(compute_dtype),
        "b2": jnp.pad(b2, ((0, 0), (0, dh))),
        "wh": jnp.pad(w_head, ((0, dh), (0, out_pad - 2 * A))).astype(compute_dtype),
        "bh": jnp.pad(b_head, ((0, 0), (0, out_pad - 2 * A))),
    }


@functools.partial(jax.jit, static_argnames=("num_actions", "block_b"))
def policy_forward(state, prep, num_actions, block_b=512):
    """Pallas forward pass.

    state: [B, num_inputs] f32.  prep: output of prepare_params().
    Returns (mean, log_std), each [B, num_actions] f32.
    """
    assert block_b % _SUBLANE == 0, "block_b must be a multiple of 8 (sublane)"

    w1, b1 = prep["w1"], prep["b1"]
    w2, b2 = prep["w2"], prep["b2"]
    wh, bh = prep["wh"], prep["bh"]

    B, I = state.shape
    Hp = w1.shape[1]
    out_pad = wh.shape[1]
    A = num_actions

    # Balanced, sublane-aligned batch tiles (padding bounded to <8 rows/tile).
    num_tiles = pl.cdiv(B, block_b)
    tb = _round_up(pl.cdiv(B, num_tiles), _SUBLANE)
    bp = num_tiles * tb
    if bp != B:
        state = jnp.pad(state, ((0, bp - B), (0, 0)))

    # Explicit VMEM budget: single-buffered resident weights + double-buffered
    # state/out tiles + activation scratch + headroom.  Never below the 32 MiB
    # default so tiny configs are unaffected; capped so it stays sane on v7x.
    wbytes = (w1.size * w1.dtype.itemsize + w2.size * w2.dtype.itemsize
              + wh.size * wh.dtype.itemsize
              + (b1.size + b2.size + bh.size) * 4)
    tile_bytes = 2 * tb * I * 4 + 2 * tb * out_pad * 4
    act_bytes = 4 * tb * Hp * 4
    vmem_limit = min(max(wbytes + tile_bytes + act_bytes + (4 << 20), 32 << 20),
                     100 << 20)

    cost = pl.CostEstimate(
        flops=2 * bp * (I * Hp + Hp * Hp + Hp * out_pad),
        transcendentals=0,
        bytes_accessed=int(wbytes) + bp * (I + out_pad) * 4,
    )

    # Weights/biases: whole-array, single-buffered VMEM residents (no per-step
    # DMA, no double-buffering).  State/output: pipelined batch tiles.
    resident = pl.BlockSpec(memory_space=pltpu.MemorySpace.VMEM)

    out = pl.pallas_call(
        functools.partial(_policy_kernel, A),
        out_shape=jax.ShapeDtypeStruct((bp, out_pad), jnp.float32),
        grid=(num_tiles,),
        in_specs=[
            pl.BlockSpec((tb, I), lambda i: (i, 0)),        # state tile (pipelined)
            resident,                                       # w1
            resident,                                       # b1
            resident,                                       # w2
            resident,                                       # b2
            resident,                                       # fused head weight
            resident,                                       # fused head bias
        ],
        out_specs=pl.BlockSpec((tb, out_pad), lambda i: (i, 0)),
        compiler_params=pltpu.CompilerParams(
            dimension_semantics=("parallel",),
            vmem_limit_bytes=int(vmem_limit)),
        cost_estimate=cost,
    )(state, w1, b1, w2, b2, wh, bh)

    # Single narrow slice of the lane-dense slab, then split lazily.
    heads = out[:B, :2 * A]
    return heads[:, :A], heads[:, A:]


def init_policy_params(key, num_inputs, num_actions, hidden_size, init_w=0.003):
    """Deterministic init mirroring PolicyNetwork.__init__ shapes.

    Weights stored as [in, out] (transpose of torch's [out, in]).
    linear1/linear2 use the PyTorch default U(-1/sqrt(fan_in), 1/sqrt(fan_in));
    mean/log_std heads use U(-init_w, init_w).
    """
    ks = jax.random.split(key, 8)

    def u(k, shape, bound):
        return jax.random.uniform(k, shape, jnp.float32, -bound, bound)

    b1_bound = 1.0 / jnp.sqrt(num_inputs)
    b2_bound = 1.0 / jnp.sqrt(hidden_size)
    return {
        "w1": u(ks[0], (num_inputs, hidden_size), b1_bound),
        "b1": u(ks[1], (1, hidden_size), b1_bound),
        "w2": u(ks[2], (hidden_size, hidden_size), b2_bound),
        "b2": u(ks[3], (1, hidden_size), b2_bound),
        "wm": u(ks[4], (hidden_size, num_actions), init_w),
        "bm": u(ks[5], (1, num_actions), init_w),
        "ws": u(ks[6], (hidden_size, num_actions), init_w),
        "bs": u(ks[7], (1, num_actions), init_w),
    }


def policy_forward_ref(state, params):
    """Plain-JAX (f32) reference for correctness check."""
    h1 = jnp.maximum(state @ params["w1"] + params["b1"], 0.0)
    h2 = jnp.maximum(h1 @ params["w2"] + params["b2"], 0.0)
    mean = h2 @ params["wm"] + params["bm"]
    log_std = jnp.clip(h2 @ params["ws"] + params["bs"], LOG_STD_MIN, LOG_STD_MAX)
    return mean, log_std


if __name__ == "__main__":
    num_inputs, num_actions, hidden_size = 8, 4, 32

    key = jax.random.PRNGKey(0)
    kp, kx1, kx2 = jax.random.split(key, 3)
    params = init_policy_params(kp, num_inputs, num_actions, hidden_size)

    # One-time prep (hoisted): fused head, hidden-dim padding, dtype cast.
    prep_bf16 = prepare_params(params, compute_dtype=jnp.bfloat16)  # production path
    prep_f32 = prepare_params(params, compute_dtype=jnp.float32)    # exactness check

    # Case 1: sublane-aligned batch, bf16 compute (relaxed tolerance).
    batch = 8
    state = jax.random.normal(kx1, (batch, num_inputs), jnp.float32)
    mean, log_std = policy_forward(state, prep_bf16, num_actions=num_actions)
    jax.block_until_ready((mean, log_std))
    mean_ref, log_std_ref = policy_forward_ref(state, params)
    assert mean.shape == (batch, num_actions)
    assert log_std.shape == (batch, num_actions)
    assert jnp.allclose(mean, mean_ref, atol=3e-2, rtol=3e-2)
    assert jnp.allclose(log_std, log_std_ref, atol=3e-2, rtol=3e-2)

    # Case 1b: f32 compute path must match the reference tightly.
    mean_f, log_std_f = policy_forward(state, prep_f32, num_actions=num_actions)
    jax.block_until_ready((mean_f, log_std_f))
    assert jnp.allclose(mean_f, mean_ref, atol=1e-5, rtol=1e-5)
    assert jnp.allclose(log_std_f, log_std_ref, atol=1e-5, rtol=1e-5)

    # Case 2: ragged batch (exercises the batch-padding path), f32 compute.
    batch2 = 5
    state2 = jax.random.normal(kx2, (batch2, num_inputs), jnp.float32)
    mean2, log_std2 = policy_forward(state2, prep_f32, num_actions=num_actions)
    jax.block_until_ready((mean2, log_std2))
    mean2_ref, log_std2_ref = policy_forward_ref(state2, params)
    assert mean2.shape == (batch2, num_actions)
    assert log_std2.shape == (batch2, num_actions)
    assert jnp.allclose(mean2, mean2_ref, atol=1e-5, rtol=1e-5)
    assert jnp.allclose(log_std2, log_std2_ref, atol=1e-5, rtol=1e-5)

    # TODO(synk): evaluate()/get_action() Normal sampling + tanh squashing are
    # host-side distribution ops and stay in plain JAX outside the kernel.

    print("KERNEL_OK")
</pallas_src>

<mosaic_0001>
module attributes {stable_mosaic.version = 11 : i64} {
  func.func @_policy_kernel(%arg0: i32, %arg1: memref<8x8xf32, #tpu.memory_space<vmem>>, %arg2: memref<8x128xbf16, #tpu.memory_space<vmem>>, %arg3: memref<1x128xf32, #tpu.memory_space<vmem>>, %arg4: memref<128x128xbf16, #tpu.memory_space<vmem>>, %arg5: memref<1x128xf32, #tpu.memory_space<vmem>>, %arg6: memref<128x128xbf16, #tpu.memory_space<vmem>>, %arg7: memref<1x128xf32, #tpu.memory_space<vmem>>, %arg8: memref<8x128xf32, #tpu.memory_space<vmem>>) attributes {dimension_semantics = [#tpu.dimension_semantics<parallel>], iteration_bounds = array<i64: 1>, scalar_prefetch = 0 : i64, scratch_operands = 0 : i64, tpu.core_type = #tpu.core_type<tc>, window_params = [{transform_indices = @transform_0, window_bounds = array<i64: 8, 8>}, {pipeline_mode = #tpu.pipeline_mode<synchronous>, transform_indices = @transform_1, window_bounds = array<i64: 8, 128>}, {pipeline_mode = #tpu.pipeline_mode<synchronous>, transform_indices = @transform_2, window_bounds = array<i64: 1, 128>}, {pipeline_mode = #tpu.pipeline_mode<synchronous>, transform_indices = @transform_3, window_bounds = array<i64: 128, 128>}, {pipeline_mode = #tpu.pipeline_mode<synchronous>, transform_indices = @transform_4, window_bounds = array<i64: 1, 128>}, {pipeline_mode = #tpu.pipeline_mode<synchronous>, transform_indices = @transform_5, window_bounds = array<i64: 128, 128>}, {pipeline_mode = #tpu.pipeline_mode<synchronous>, transform_indices = @transform_6, window_bounds = array<i64: 1, 128>}, {transform_indices = @transform_7, window_bounds = array<i64: 8, 128>}]} {
    %c0 = arith.constant 0 : index
    %c0_0 = arith.constant 0 : index
    %0 = vector.load %arg1[%c0, %c0_0] : memref<8x8xf32, #tpu.memory_space<vmem>>, vector<8x8xf32>
    %1 = arith.truncf %0 : vector<8x8xf32> to vector<8x8xbf16>
    %c0_1 = arith.constant 0 : index
    %c0_2 = arith.constant 0 : index
    %2 = vector.load %arg2[%c0_1, %c0_2] : memref<8x128xbf16, #tpu.memory_space<vmem>>, vector<8x128xbf16>
    %cst = arith.constant dense<0.000000e+00> : vector<8x128xf32>
    %3 = tpu.matmul %1, %2, %cst {dimension_numbers = #tpu.dot_dimension_numbers<[1], [0], [0], [1], [0, 0, 1, 1], [], []>} : vector<8x8xbf16>, vector<8x128xbf16>, vector<8x128xf32> -> vector<8x128xf32>
    %c0_3 = arith.constant 0 : index
    %c0_4 = arith.constant 0 : index
    %4 = vector.load %arg3[%c0_3, %c0_4] : memref<1x128xf32, #tpu.memory_space<vmem>>, vector<1x128xf32>
    %5 = vector.broadcast %4 : vector<1x128xf32> to vector<8x128xf32>
    %6 = arith.addf %3, %5 : vector<8x128xf32>
    %cst_5 = arith.constant 0.000000e+00 : f32
    %7 = vector.broadcast %cst_5 : f32 to vector<8x128xf32>
    %8 = arith.maximumf %6, %7 : vector<8x128xf32>
    %9 = arith.truncf %8 : vector<8x128xf32> to vector<8x128xbf16>
    %c0_6 = arith.constant 0 : index
    %c0_7 = arith.constant 0 : index
    %10 = vector.load %arg4[%c0_6, %c0_7] : memref<128x128xbf16, #tpu.memory_space<vmem>>, vector<128x128xbf16>
    %cst_8 = arith.constant dense<0.000000e+00> : vector<8x128xf32>
    %11 = tpu.matmul %9, %10, %cst_8 {dimension_numbers = #tpu.dot_dimension_numbers<[1], [0], [0], [1], [0, 0, 1, 1], [], []>} : vector<8x128xbf16>, vector<128x128xbf16>, vector<8x128xf32> -> vector<8x128xf32>
    %c0_9 = arith.constant 0 : index
    %c0_10 = arith.constant 0 : index
    %12 = vector.load %arg5[%c0_9, %c0_10] : memref<1x128xf32, #tpu.memory_space<vmem>>, vector<1x128xf32>
    %13 = vector.broadcast %12 : vector<1x128xf32> to vector<8x128xf32>
    %14 = arith.addf %11, %13 : vector<8x128xf32>
    %cst_11 = arith.constant 0.000000e+00 : f32
    %15 = vector.broadcast %cst_11 : f32 to vector<8x128xf32>
    %16 = arith.maximumf %14, %15 : vector<8x128xf32>
    %17 = arith.truncf %16 : vector<8x128xf32> to vector<8x128xbf16>
    %c0_12 = arith.constant 0 : index
    %c0_13 = arith.constant 0 : index
    %18 = vector.load %arg6[%c0_12, %c0_13] : memref<128x128xbf16, #tpu.memory_space<vmem>>, vector<128x128xbf16>
    %cst_14 = arith.constant dense<0.000000e+00> : vector<8x128xf32>
    %19 = tpu.matmul %17, %18, %cst_14 {dimension_numbers = #tpu.dot_dimension_numbers<[1], [0], [0], [1], [0, 0, 1, 1], [], []>} : vector<8x128xbf16>, vector<128x128xbf16>, vector<8x128xf32> -> vector<8x128xf32>
    %c0_15 = arith.constant 0 : index
    %c0_16 = arith.constant 0 : index
    %20 = vector.load %arg7[%c0_15, %c0_16] : memref<1x128xf32, #tpu.memory_space<vmem>>, vector<1x128xf32>
    %21 = vector.broadcast %20 : vector<1x128xf32> to vector<8x128xf32>
    %22 = arith.addf %19, %21 : vector<8x128xf32>
    %23 = tpu.iota {dimensions = array<i32: 1>} : vector<1x128xi32>
    %c4_i32 = arith.constant 4 : i32
    %24 = vector.broadcast %c4_i32 : i32 to vector<1x128xi32>
    %25 = arith.cmpi sge, %23, %24 : vector<1x128xi32>
    %cst_17 = arith.constant -2.000000e+01 : f32
    %cst_18 = arith.constant 2.000000e+00 : f32
    %26 = vector.broadcast %cst_17 : f32 to vector<8x128xf32>
    %27 = arith.maximumf %26, %22 : vector<8x128xf32>
    %28 = vector.broadcast %cst_18 : f32 to vector<8x128xf32>
    %29 = arith.minimumf %28, %27 : vector<8x128xf32>
    %30 = vector.shape_cast %25 : vector<1x128xi1> to vector<1x128xi1>
    %31 = vector.broadcast %30 : vector<1x128xi1> to vector<8x128xi1>
    %32 = arith.select %31, %29, %22 : vector<8x128xi1>, vector<8x128xf32>
    %c0_19 = arith.constant 0 : index
    %c0_20 = arith.constant 0 : index
    %33 = vector.load %arg8[%c0_19, %c0_20] : memref<8x128xf32, #tpu.memory_space<vmem>>, vector<8x128xf32>
    tpu.vector_store %arg8[%c0_19, %c0_20], %32 {strides = array<i32>} : memref<8x128xf32, #tpu.memory_space<vmem>>, vector<8x128xf32>,
    return
  }
  func.func @transform_0(%arg0: i32) -> (i32, i32) {
    %c0_i32 = arith.constant 0 : i32
    %c0_i32_0 = arith.constant 0 : i32
    return %arg0, %c0_i32 : i32, i32
  }
  func.func @transform_1(%arg0: i32) -> (i32, i32) {
    %c0_i32 = arith.constant 0 : i32
    %c0_i32_0 = arith.constant 0 : i32
    %c0_i32_1 = arith.constant 0 : i32
    return %c0_i32, %c0_i32_0 : i32, i32
  }
  func.func @transform_2(%arg0: i32) -> (i32, i32) {
    %c0_i32 = arith.constant 0 : i32
    %c0_i32_0 = arith.constant 0 : i32
    %c0_i32_1 = arith.constant 0 : i32
    return %c0_i32, %c0_i32_0 : i32, i32
  }
  func.func @transform_3(%arg0: i32) -> (i32, i32) {
    %c0_i32 = arith.constant 0 : i32
    %c0_i32_0 = arith.constant 0 : i32
    %c0_i32_1 = arith.constant 0 : i32
    return %c0_i32, %c0_i32_0 : i32, i32
  }
  func.func @transform_4(%arg0: i32) -> (i32, i32) {
    %c0_i32 = arith.constant 0 : i32
    %c0_i32_0 = arith.constant 0 : i32
    %c0_i32_1 = arith.constant 0 : i32
    return %c0_i32, %c0_i32_0 : i32, i32
  }
  func.func @transform_5(%arg0: i32) -> (i32, i32) {
    %c0_i32 = arith.constant 0 : i32
    %c0_i32_0 = arith.constant 0 : i32
    %c0_i32_1 = arith.constant 0 : i32
    return %c0_i32, %c0_i32_0 : i32, i32
  }
  func.func @transform_6(%arg0: i32) -> (i32, i32) {
    %c0_i32 = arith.constant 0 : i32
    %c0_i32_0 = arith.constant 0 : i32
    %c0_i32_1 = arith.constant 0 : i32
    return %c0_i32, %c0_i32_0 : i32, i32
  }
  func.func @transform_7(%arg0: i32) -> (i32, i32) {
    %c0_i32 = arith.constant 0 : i32
    %c0_i32_0 = arith.constant 0 : i32
    return %arg0, %c0_i32 : i32, i32
  }
}

</mosaic_0001>

<llo_original>
// kernel: policy_forward.1
$region0: #{policy_forward.1}
  #allocation0 [shape = 'u32[]', space=smem, size = 0x4, offset = 0x4, fixed_abs, tag = 'smem constant byte address 0x4 - core index']
  #allocation1 [shape = 'u32[144,128]{1,0:T(1,128)}', space=vmem, size = 0x12000, scoped, tag = 'internal scratch']
  %s0 = inlined_call_operand.hbm [shape: f32[8,8], index: 0, kind: input, shape index: {}]
  %s1 = inlined_call_operand.vmem [shape: bf16[8,128], index: 1, kind: input, shape index: {}]
  %s2 = inlined_call_operand.vmem [shape: f32[1,128], index: 2, kind: input, shape index: {}]
  %s3 = inlined_call_operand.hbm [shape: bf16[128,128], index: 3, kind: input, shape index: {}]
  %s4 = inlined_call_operand.vmem [shape: f32[1,128], index: 4, kind: input, shape index: {}]
  %s5 = inlined_call_operand.hbm [shape: bf16[128,128], index: 5, kind: input, shape index: {}]
  %s6 = inlined_call_operand.vmem [shape: f32[1,128], index: 6, kind: input, shape index: {}]
  %s7 = inlined_call_operand.vmem [shape: f32[8,128], index: 7, kind: output, shape index: {}]
  %s8 = sld [smem:[#allocation0]]
  $region50: #{policy_forward.1} parent=0
    _
  %s10 = ssub.s32 1, %s8
  %s11 = scalar_select 0, %s10, %s8
  $region1: #{policy_forward.1} parent=0
    #allocation2 [shape = 'u8[4096]{0}', space=vmem, size = 0x1000, scoped, tag = 'input window, operand 0, single buffered']
    #allocation3 [shape = 's32[1]{0}', space=sflag, size = 0x4, scoped, tag = 'scoped memory for policy_forward.1']
    #allocation4 [shape = 'u8[32768]{0}', space=vmem, size = 0x8000, scoped, tag = 'input window, operand 3, single buffered']
    #allocation5 [shape = 's32[1]{0}', space=sflag, size = 0x4, scoped, tag = 'scoped memory for policy_forward.1']
    #allocation6 [shape = 'u8[32768]{0}', space=vmem, size = 0x8000, scoped, tag = 'input window, operand 5, single buffered']
    %12 = vsyncpa [#allocation3], 0
    %13 = vsyncpa [#allocation5], 0
    // Predicated region
    $region2: #{policy_forward.1} parent=1 // pred_check
      _
    $region3: #{policy_forward.1} parent=1 // pred_check_branch
      %15 = sbr.rel (0) target = $region5
    $region4: #{policy_forward.1} parent=1 // pred_region
      %s17 = ssub.s32 128, 128
      %18 = vsyncadd [#allocation3], %s17
      %s20 = sshll.u32 [#allocation2], 4
      %s21 = int_to_ptr.vmem [resolvable:$true] %s20
      %23 = dma.hbm_to_vmem [thread:$0]  %s0, 128, %s21, [#allocation3]
    $region5: #{policy_forward.1} parent=1 // pred_fallthru
      _
    // Predicated region
    $region6: #{policy_forward.1} parent=1 // pred_check
      _
    $region7: #{policy_forward.1} parent=1 // pred_check_branch
      %25 = sbr.rel (0) target = $region9
    $region8: #{policy_forward.1} parent=1 // pred_region
      _
    $region9: #{policy_forward.1} parent=1 // pred_fallthru
      _
    // Predicated region
    $region10: #{policy_forward.1} parent=1 // pred_check
      _
    $region11: #{policy_forward.1} parent=1 // pred_check_branch
      %27 = sbr.rel (0) target = $region13
    $region12: #{policy_forward.1} parent=1 // pred_region
      _
    $region13: #{policy_forward.1} parent=1 // pred_fallthru
      _
    // Predicated region
    $region14: #{policy_forward.1} parent=1 // pred_check
      _
    $region15: #{policy_forward.1} parent=1 // pred_check_branch
      %29 = sbr.rel (0) target = $region17
    $region16: #{policy_forward.1} parent=1 // pred_region
      %s31 = ssub.s32 1024, 1024
      %32 = vsyncadd [#allocation5], %s31
      %s33 = sshll.u32 [#allocation4], 4
      %s34 = int_to_ptr.vmem [resolvable:$true] %s33
      %39 = dma.hbm_to_vmem [thread:$0]  %s3, 1024, %s34, [#allocation5], 64, 64, 4
    $region17: #{policy_forward.1} parent=1 // pred_fallthru
      _
    // Predicated region
    $region18: #{policy_forward.1} parent=1 // pred_check
      _
    $region19: #{policy_forward.1} parent=1 // pred_check_branch
      %41 = sbr.rel (0) target = $region21
    $region20: #{policy_forward.1} parent=1 // pred_region
      _
    $region21: #{policy_forward.1} parent=1 // pred_fallthru
      _
    // Predicated region
    $region22: #{policy_forward.1} parent=1 // pred_check
      _
    $region23: #{policy_forward.1} parent=1 // pred_check_branch
      %43 = sbr.rel (0) target = $region25
    $region24: #{policy_forward.1} parent=1 // pred_region
      %s45 = ssub.s32 1024, 1024
      %46 = vsyncadd [#allocation5], %s45
      %s47 = sshll.u32 [#allocation6], 4
      %s48 = int_to_ptr.vmem [resolvable:$true] %s47
      %53 = dma.hbm_to_vmem [thread:$0]  %s5, 1024, %s48, [#allocation5], 64, 64, 4
    $region25: #{policy_forward.1} parent=1 // pred_fallthru
      _
    // Predicated region
    $region26: #{policy_forward.1} parent=1 // pred_check
      _
    $region27: #{policy_forward.1} parent=1 // pred_check_branch
      %55 = sbr.rel (0) target = $region29
    $region28: #{policy_forward.1} parent=1 // pred_region
      _
    $region29: #{policy_forward.1} parent=1 // pred_fallthru
      _
    // Predicated region
    $region30: #{policy_forward.1} parent=1 // pred_check
      _
    $region31: #{policy_forward.1} parent=1 // pred_check_branch
      %57 = sbr.rel (0) target = $region33
    $region32: #{policy_forward.1} parent=1 // pred_region
      %58 = dma.done [#allocation3], 128
    $region33: #{policy_forward.1} parent=1 // pred_fallthru
      _
    // Predicated region
    $region34: #{policy_forward.1} parent=1 // pred_check
      _
    $region35: #{policy_forward.1} parent=1 // pred_check_branch
      %60 = sbr.rel (0) target = $region37
    $region36: #{policy_forward.1} parent=1 // pred_region
      %61 = dma.done [#allocation5], 1024
    $region37: #{policy_forward.1} parent=1 // pred_fallthru
      _
    // Predicated region
    $region38: #{policy_forward.1} parent=1 // pred_check
      _
    $region39: #{policy_forward.1} parent=1 // pred_check_branch
      %63 = sbr.rel (0) target = $region41
    $region40: #{policy_forward.1} parent=1 // pred_region
      %64 = dma.done [#allocation5], 1024
    $region41: #{policy_forward.1} parent=1 // pred_fallthru
      _
    %v66 = vld [vmem:[#allocation2] sm:$0xff]
    %v67 = vpack.c.bf16 %v66, %v66
    %v68 = vld [vmem:[%s1] sm:$0xf]
    %v69 = vld [vmem:[%s2] sm:$0x1]
    %v71 = vlaneseq
    %v72 = vshrl.u32 %v71, 7
    %v73 = vsub.s32 0, %v72
    %v74 = vrot.slane %v69, %v73
    %vm76 = vcmask 64512
    %v78 = vsel %vm76, %v67, 0
    %vm80 = vcmask 1043456
    %v82 = vsel %vm80, %v68, 0
    %84 = vmatprep.subr.bf16.mxu0 0
    %85 = vmatpush1.bf16.msra.mxu0 %v82
    %86 = vmatprep.subr.bf16.mxu0 0
    %87 = vmatpush1.bf16.msra.mxu0 0
    %88 = vmatprep.subr.bf16.mxu0 0
    %89 = vmatpush1.bf16.msra.mxu0 0
    %90 = vmatprep.subr.bf16.mxu0 0
    %91 = vmatpush1.bf16.msra.mxu0 0
    %92 = vmatprep.subr.bf16.mxu0 0
    %93 = vmatpush1.bf16.msra.mxu0 0
    %94 = vmatprep.subr.bf16.mxu0 0
    %95 = vmatpush1.bf16.msra.mxu0 0
    %96 = vmatprep.subr.bf16.mxu0 0
    %97 = vmatpush1.bf16.msra.mxu0 0
    %98 = vmatprep.subr.bf16.mxu0 0
    %99 = vmatpush1.bf16.msra.mxu0 0
    %100 = vmatprep.subr.bf16.mxu0 0
    %101 = vmatpush1.bf16.msra.mxu0 0
    %102 = vmatprep.subr.bf16.mxu0 0
    %103 = vmatpush1.bf16.msra.mxu0 0
    %104 = vmatprep.subr.bf16.mxu0 0
    %105 = vmatpush1.bf16.msra.mxu0 0
    %106 = vmatprep.subr.bf16.mxu0 0
    %107 = vmatpush1.bf16.msra.mxu0 0
    %108 = vmatprep.subr.bf16.mxu0 0
    %109 = vmatpush1.bf16.msra.mxu0 0
    %110 = vmatprep.subr.bf16.mxu0 0
    %111 = vmatpush1.bf16.msra.mxu0 0
    %112 = vmatprep.subr.bf16.mxu0 0
    %113 = vmatpush1.bf16.msra.mxu0 0
    %114 = vmatprep.subr.bf16.mxu0 0
    %115 = vmatpush1.bf16.msra.mxu0 0
    %116 = vmatprep.mubr.bf16.mxu0 0
    %117 = vmatmul.mubr.bf16.gmra.mrb[0].mxu0 %v78
    %v118 = vpop.f32.mrb[0].mxu0
    %v119 = vadd.f32 %v74, %v118
    %v120 = vpop.f32.mrb[0].mxu0
    %v121 = vpop.f32.mrb[0].mxu0
    %v122 = vpop.f32.mrb[0].mxu0
    %123 = vdwg.mxu0
    %v124 = vmax.f32 %v119, 0.0
    %v125 = vpack.c.bf16 %v124, %v124
    %v126 = vld [vmem:[#allocation4] sm:$0xf]
    %v127 = vld [vmem:[#allocation4 + $0x4] sm:$0xf]
    %v128 = vld [vmem:[#allocation4 + $0x8] sm:$0xf]
    %v129 = vld [vmem:[#allocation4 + $0xc] sm:$0xf]
    %v130 = vld [vmem:[#allocation4 + $0x10] sm:$0xf]
    %v131 = vld [vmem:[#allocation4 + $0x14] sm:$0xf]
    %v132 = vld [vmem:[#allocation4 + $0x18] sm:$0xf]
    %v133 = vld [vmem:[#allocation4 + $0x1c] sm:$0xf]
    %v134 = vld [vmem:[#allocation4 + $0x20] sm:$0xf]
    %v135 = vld [vmem:[#allocation4 + $0x24] sm:$0xf]
    %v136 = vld [vmem:[#allocation4 + $0x28] sm:$0xf]
    %v137 = vld [vmem:[#allocation4 + $0x2c] sm:$0xf]
    %v138 = vld [vmem:[#allocation4 + $0x30] sm:$0xf]
    %v139 = vld [vmem:[#allocation4 + $0x34] sm:$0xf]
    %v140 = vld [vmem:[#allocation4 + $0x38] sm:$0xf]
    %v141 = vld [vmem:[#allocation4 + $0x3c] sm:$0xf]
    %v142 = vld [vmem:[%s4] sm:$0x1]
    %v144 = vlaneseq
    %v145 = vshrl.u32 %v144, 7
    %v146 = vsub.s32 0, %v145
    %v147 = vrot.slane %v142, %v146
    %v165 = vunpack.c.l.b16 %v126
    %v166 = vunpack.c.l.b16 %v127
    %v167 = vunpack.c.l.b16 %v128
    %v168 = vunpack.c.l.b16 %v129
    %v169 = vunpack.c.l.b16 %v130
    %v170 = vunpack.c.l.b16 %v131
    %v171 = vunpack.c.l.b16 %v132
    %v172 = vunpack.c.l.b16 %v133
    %v173 = vunpack.c.l.b16 %v134
    %v174 = vunpack.c.l.b16 %v135
    %v175 = vunpack.c.l.b16 %v136
    %v176 = vunpack.c.l.b16 %v137
    %v177 = vunpack.c.l.b16 %v138
    %v178 = vunpack.c.l.b16 %v139
    %v179 = vunpack.c.l.b16 %v140
    %v180 = vunpack.c.l.b16 %v141
    %v181 = vpack.c.b16 %v166, %v165
    %v182 = vpack.c.b16 %v168, %v167
    %v183 = vpack.c.b16 %v170, %v169
    %v184 = vpack.c.b16 %v172, %v171
    %v185 = vpack.c.b16 %v174, %v173
    %v186 = vpack.c.b16 %v176, %v175
    %v187 = vpack.c.b16 %v178, %v177
    %v188 = vpack.c.b16 %v180, %v179
    %197 = vmatprep.subr.bf16.mxu0 0
    %198 = vmatpush1.bf16.msra.mxu0 %v181
    %199 = vmatprep.subr.bf16.mxu0 0
    %200 = vmatpush1.bf16.msra.mxu0 %v182
    %201 = vmatprep.subr.bf16.mxu0 0
    %202 = vmatpush1.bf16.msra.mxu0 %v183
    %203 = vmatprep.subr.bf16.mxu0 0
    %204 = vmatpush1.bf16.msra.mxu0 %v184
    %205 = vmatprep.subr.bf16.mxu0 0
    %206 = vmatpush1.bf16.msra.mxu0 %v185
    %207 = vmatprep.subr.bf16.mxu0 0
    %208 = vmatpush1.bf16.msra.mxu0 %v186
    %209 = vmatprep.subr.bf16.mxu0 0
    %210 = vmatpush1.bf16.msra.mxu0 %v187
    %211 = vmatprep.subr.bf16.mxu0 0
    %212 = vmatpush1.bf16.msra.mxu0 %v188
    %213 = vmatprep.subr.bf16.mxu0 0
    %214 = vmatpush1.bf16.msra.mxu0 0
    %215 = vmatprep.subr.bf16.mxu0 0
    %216 = vmatpush1.bf16.msra.mxu0 0
    %217 = vmatprep.subr.bf16.mxu0 0
    %218 = vmatpush1.bf16.msra.mxu0 0
    %219 = vmatprep.subr.bf16.mxu0 0
    %220 = vmatpush1.bf16.msra.mxu0 0
    %221 = vmatprep.subr.bf16.mxu0 0
    %222 = vmatpush1.bf16.msra.mxu0 0
    %223 = vmatprep.subr.bf16.mxu0 0
    %224 = vmatpush1.bf16.msra.mxu0 0
    %225 = vmatprep.subr.bf16.mxu0 0
    %226 = vmatpush1.bf16.msra.mxu0 0
    %227 = vmatprep.subr.bf16.mxu0 0
    %228 = vmatpush1.bf16.msra.mxu0 0
    %229 = vmatprep.mubr.bf16.mxu0 0
    %230 = vmatmul.mubr.bf16.gmra.mrb[0].mxu0 %v125
    %v231 = vpop.f32.mrb[0].mxu0
    %v232 = vadd.f32 %v147, %v231
    %v233 = vpop.f32.mrb[0].mxu0
    %v234 = vpop.f32.mrb[0].mxu0
    %v235 = vpop.f32.mrb[0].mxu0
    %236 = vdwg.mxu0
    %v237 = vmax.f32 %v232, 0.0
    %v238 = vpack.c.bf16 %v237, %v237
    %v239 = vld [vmem:[#allocation6] sm:$0xf]
    %v240 = vld [vmem:[#allocation6 + $0x4] sm:$0xf]
    %v241 = vld [vmem:[#allocation6 + $0x8] sm:$0xf]
    %v242 = vld [vmem:[#allocation6 + $0xc] sm:$0xf]
    %v243 = vld [vmem:[#allocation6 + $0x10] sm:$0xf]
    %v244 = vld [vmem:[#allocation6 + $0x14] sm:$0xf]
    %v245 = vld [vmem:[#allocation6 + $0x18] sm:$0xf]
    %v246 = vld [vmem:[#allocation6 + $0x1c] sm:$0xf]
    %v247 = vld [vmem:[#allocation6 + $0x20] sm:$0xf]
    %v248 = vld [vmem:[#allocation6 + $0x24] sm:$0xf]
    %v249 = vld [vmem:[#allocation6 + $0x28] sm:$0xf]
    %v250 = vld [vmem:[#allocation6 + $0x2c] sm:$0xf]
    %v251 = vld [vmem:[#allocation6 + $0x30] sm:$0xf]
    %v252 = vld [vmem:[#allocation6 + $0x34] sm:$0xf]
    %v253 = vld [vmem:[#allocation6 + $0x38] sm:$0xf]
    %v254 = vld [vmem:[#allocation6 + $0x3c] sm:$0xf]
    %v255 = vld [vmem:[%s6] sm:$0x1]
    %v257 = vlaneseq
    %v258 = vshrl.u32 %v257, 7
    %v259 = vsub.s32 0, %v258
    %v260 = vrot.slane %v255, %v259
    %v278 = vunpack.c.l.b16 %v239
    %v279 = vunpack.c.l.b16 %v240
    %v280 = vunpack.c.l.b16 %v241
    %v281 = vunpack.c.l.b16 %v242
    %v282 = vunpack.c.l.b16 %v243
    %v283 = vunpack.c.l.b16 %v244
    %v284 = vunpack.c.l.b16 %v245
    %v285 = vunpack.c.l.b16 %v246
    %v286 = vunpack.c.l.b16 %v247
    %v287 = vunpack.c.l.b16 %v248
    %v288 = vunpack.c.l.b16 %v249
    %v289 = vunpack.c.l.b16 %v250
    %v290 = vunpack.c.l.b16 %v251
    %v291 = vunpack.c.l.b16 %v252
    %v292 = vunpack.c.l.b16 %v253
    %v293 = vunpack.c.l.b16 %v254
    %v294 = vpack.c.b16 %v279, %v278
    %v295 = vpack.c.b16 %v281, %v280
    %v296 = vpack.c.b16 %v283, %v282
    %v297 = vpack.c.b16 %v285, %v284
    %v298 = vpack.c.b16 %v287, %v286
    %v299 = vpack.c.b16 %v289, %v288
    %v300 = vpack.c.b16 %v291, %v290
    %v301 = vpack.c.b16 %v293, %v292
    %310 = vmatprep.subr.bf16.mxu0 0
    %311 = vmatpush1.bf16.msra.mxu0 %v294
    %312 = vmatprep.subr.bf16.mxu0 0
    %313 = vmatpush1.bf16.msra.mxu0 %v295
    %314 = vmatprep.subr.bf16.mxu0 0
    %315 = vmatpush1.bf16.msra.mxu0 %v296
    %316 = vmatprep.subr.bf16.mxu0 0
    %317 = vmatpush1.bf16.msra.mxu0 %v297
    %318 = vmatprep.subr.bf16.mxu0 0
    %319 = vmatpush1.bf16.msra.mxu0 %v298
    %320 = vmatprep.subr.bf16.mxu0 0
    %321 = vmatpush1.bf16.msra.mxu0 %v299
    %322 = vmatprep.subr.bf16.mxu0 0
    %323 = vmatpush1.bf16.msra.mxu0 %v300
    %324 = vmatprep.subr.bf16.mxu0 0
    %325 = vmatpush1.bf16.msra.mxu0 %v301
    %326 = vmatprep.subr.bf16.mxu0 0
    %327 = vmatpush1.bf16.msra.mxu0 0
    %328 = vmatprep.subr.bf16.mxu0 0
    %329 = vmatpush1.bf16.msra.mxu0 0
    %330 = vmatprep.subr.bf16.mxu0 0
    %331 = vmatpush1.bf16.msra.mxu0 0
    %332 = vmatprep.subr.bf16.mxu0 0
    %333 = vmatpush1.bf16.msra.mxu0 0
    %334 = vmatprep.subr.bf16.mxu0 0
    %335 = vmatpush1.bf16.msra.mxu0 0
    %336 = vmatprep.subr.bf16.mxu0 0
    %337 = vmatpush1.bf16.msra.mxu0 0
    %338 = vmatprep.subr.bf16.mxu0 0
    %339 = vmatpush1.bf16.msra.mxu0 0
    %340 = vmatprep.subr.bf16.mxu0 0
    %341 = vmatpush1.bf16.msra.mxu0 0
    %342 = vmatprep.mubr.bf16.mxu0 0
    %343 = vmatmul.mubr.bf16.gmra.mrb[0].mxu0 %v238
    %v344 = vpop.f32.mrb[0].mxu0
    %v345 = vadd.f32 %v260, %v344
    %v346 = vpop.f32.mrb[0].mxu0
    %v347 = vpop.f32.mrb[0].mxu0
    %v348 = vpop.f32.mrb[0].mxu0
    %349 = vdwg.mxu0
    %v350 = vlaneseq
    %v351 = vand.u32 %v350, 127
    %vm352 = vcmp.ge.s32.totalorder %v351, 4
    %v353 = vmax.f32 %v345, -20.0
    %v354 = vmin.f32 %v353, 2.0
    %v355 = vsel %vm352, 1, 0
    %vm356 = vcmp.eq.s32.totalorder %v355, 1
    %v357 = vsel %vm356, %v354, %v345
    %358 = vst [vmem:[%s7] sm:$0xff] %v357
    // Predicated region
    $region42: #{policy_forward.1} parent=1 // pred_check
      _
    $region43: #{policy_forward.1} parent=1 // pred_check_branch
      %360 = sbr.rel (0) target = $region45
    $region44: #{policy_forward.1} parent=1 // pred_region
      _
    $region45: #{policy_forward.1} parent=1 // pred_fallthru
      _
    // Predicated region
    $region46: #{policy_forward.1} parent=1 // pred_check
      _
    $region47: #{policy_forward.1} parent=1 // pred_check_branch
      %362 = sbr.rel (0) target = $region49
    $region48: #{policy_forward.1} parent=1 // pred_region
      _
    $region49: #{policy_forward.1} parent=1 // pred_fallthru
      _
    %363 = vsyncpa [#allocation3], 1
    %364 = vsyncpa [#allocation5], 1

</llo_original>
